<compile_context>
chip_gen: v6e
topology: v6e:2x2x1
jax: 0.10.0
libtpu: 0.0.40
codegen_flags: <defaults>
</compile_context>

<pallas_src>
import functools

import jax
import jax.numpy as jnp
from jax.experimental import pallas as pl
from jax.experimental.pallas import tpu as pltpu

_LANE = 128     # lane width (last-dim tile)
_SUBLANE = 8    # f32 sublane count (second-to-last-dim tile)


# ----------------------------------------------------------------------------
# Padding helpers
# ----------------------------------------------------------------------------
def _round_up(n, m):
    return ((n + m - 1) // m) * m


def _pad_batch(b):
    # Fixed buckets: 8, 16, 32, 64, 128, then multiples of 128.
    if b <= _LANE:
        return max(_SUBLANE, pl.next_power_of_2(b))
    return _round_up(b, _LANE)


def _pad2(a, rows, cols):
    r, c = a.shape
    return jnp.pad(a, ((0, rows - r), (0, cols - c)))


# ----------------------------------------------------------------------------
# Kernels (fused MLP + greedy-action argmax epilogue)
# ----------------------------------------------------------------------------
def _write_argmax(q, out_dim, act_ref):
    """Row-wise argmax over the first `out_dim` (logical) lanes of q."""
    col = jax.lax.broadcasted_iota(jnp.int32, q.shape, 1)
    valid = col < out_dim
    qm = jnp.where(valid, q, -jnp.inf)
    row_max = jnp.max(qm, axis=-1, keepdims=True)
    # Smallest valid column attaining the max (ties -> first, like argmax).
    idx = jnp.where((qm == row_max) & valid, col, jnp.int32(q.shape[-1]))
    act_ref[...] = jnp.min(idx, axis=-1, keepdims=True)


def _qnet3_kernel(out_dim, x_ref, w1_ref, b1_ref, w2_ref, b2_ref, w3_ref,
                  b3_ref, q_ref, act_ref):
    """3-layer variant: relu(relu(x@W1+b1)@W2+b2)@W3+b3 (last layer no relu)."""
    x = x_ref[...]
    h = jnp.dot(x, w1_ref[...], preferred_element_type=jnp.float32) + b1_ref[...]
    h = jnp.maximum(h, 0.0)
    h = jnp.dot(h, w2_ref[...], preferred_element_type=jnp.float32) + b2_ref[...]
    h = jnp.maximum(h, 0.0)
    q = jnp.dot(h, w3_ref[...], preferred_element_type=jnp.float32) + b3_ref[...]
    q_ref[...] = q.astype(q_ref.dtype)
    _write_argmax(q, out_dim, act_ref)


def _qnet2_kernel(out_dim, x_ref, w1_ref, b1_ref, w2_ref, b2_ref, q_ref,
                  act_ref):
    """2-layer variant (hidden_size2 falsy): relu(x@W1+b1)@W2+b2."""
    x = x_ref[...]
    h = jnp.dot(x, w1_ref[...], preferred_element_type=jnp.float32) + b1_ref[...]
    h = jnp.maximum(h, 0.0)
    q = jnp.dot(h, w2_ref[...], preferred_element_type=jnp.float32) + b2_ref[...]
    q_ref[...] = q.astype(q_ref.dtype)
    _write_argmax(q, out_dim, act_ref)


# ----------------------------------------------------------------------------
# Wrapper
# ----------------------------------------------------------------------------
def _full_spec(shape):
    # Whole (small, pre-padded) weight/bias resident in VMEM every grid step.
    return pl.BlockSpec(shape, lambda i: (0, 0))


@functools.partial(jax.jit, static_argnames=("out_dim", "return_action"))
def qnet_forward(x, params, *, out_dim, return_action=False):
    """Runs the fused MLP Pallas kernel.

    params: dict (pre-padded to 128-multiples) with keys w1,b1,w2,b2 and
            optionally w3,b3.  `out_dim` is the logical output size.
    """
    batch, in_features = x.shape
    in_pad = params["w1"].shape[0]
    out_pad = (params["w3"] if "w3" in params else params["w2"]).shape[1]

    b_pad = _pad_batch(batch)
    tb = min(_LANE, b_pad)            # batch block: <=128 rows, multiple of 8
    grid = (b_pad // tb,)

    xp = jnp.pad(x.astype(jnp.float32),
                 ((0, b_pad - batch), (0, in_pad - in_features)))

    if "w3" in params:
        args = (xp, params["w1"], params["b1"], params["w2"], params["b2"],
                params["w3"], params["b3"])
        kernel = functools.partial(_qnet3_kernel, out_dim)
    else:
        args = (xp, params["w1"], params["b1"], params["w2"], params["b2"])
        kernel = functools.partial(_qnet2_kernel, out_dim)

    in_specs = ([pl.BlockSpec((tb, in_pad), lambda i: (i, 0))]
                + [_full_spec(a.shape) for a in args[1:]])

    q_pad, act_pad = pl.pallas_call(
        kernel,
        grid=grid,
        in_specs=in_specs,
        out_specs=(pl.BlockSpec((tb, out_pad), lambda i: (i, 0)),
                   pl.BlockSpec((tb, 1), lambda i: (i, 0))),
        out_shape=(jax.ShapeDtypeStruct((b_pad, out_pad), jnp.float32),
                   jax.ShapeDtypeStruct((b_pad, 1), jnp.int32)),
        compiler_params=pltpu.CompilerParams(
            dimension_semantics=("parallel",)),  # shards rows across v7x's 2 TCs
    )(*args)

    q = q_pad[:batch, :out_dim]
    if return_action:
        return q, act_pad[:batch, 0]
    return q


# ----------------------------------------------------------------------------
# Deterministic parameter init (PyTorch nn.Linear-style uniform(-1/sqrt(fan_in)))
# stored pre-padded to lane-dense (128-multiple) tiles; pads are exact zeros.
# ----------------------------------------------------------------------------
def init_qnet_params(key, input_size, hidden_size1, hidden_size2, output_size):
    def _linear(k, fan_in, fan_out):
        kw, kb = jax.random.split(k)
        bound = 1.0 / jnp.sqrt(jnp.float32(fan_in))
        w = jax.random.uniform(kw, (fan_in, fan_out), jnp.float32, -bound, bound)
        b = jax.random.uniform(kb, (1, fan_out), jnp.float32, -bound, bound)
        wp = _pad2(w, _round_up(fan_in, _LANE), _round_up(fan_out, _LANE))
        bp = _pad2(b, 1, _round_up(fan_out, _LANE))
        return wp, bp

    params = {}
    if hidden_size2:
        k1, k2, k3 = jax.random.split(key, 3)
        params["w1"], params["b1"] = _linear(k1, input_size, hidden_size1)
        params["w2"], params["b2"] = _linear(k2, hidden_size1, hidden_size2)
        params["w3"], params["b3"] = _linear(k3, hidden_size2, output_size)
    else:
        k1, k2 = jax.random.split(key, 2)
        params["w1"], params["b1"] = _linear(k1, input_size, hidden_size1)
        params["w2"], params["b2"] = _linear(k2, hidden_size1, output_size)
    return params


def qnet_reference(x, params, out_dim):
    """Pure-JAX reference mirroring the PyTorch forward (on padded params)."""
    in_pad = params["w1"].shape[0]
    xp = jnp.pad(x, ((0, 0), (0, in_pad - x.shape[1])))
    h = jnp.maximum(xp @ params["w1"] + params["b1"], 0.0)
    if "w3" in params:
        h = jnp.maximum(h @ params["w2"] + params["b2"], 0.0)
        q = h @ params["w3"] + params["b3"]
    else:
        q = h @ params["w2"] + params["b2"]
    return q[:, :out_dim]


if __name__ == "__main__":
    key = jax.random.PRNGKey(0)
    kx, kxl, kp3, kp2 = jax.random.split(key, 4)

    # Small shapes consistent with the module (snake-game style Q-net).
    batch, input_size, hidden1, hidden2, output_size = 2, 11, 32, 32, 3
    x = jax.random.normal(kx, (batch, input_size), dtype=jnp.float32)

    # 3-layer variant (hidden_size2 truthy), with the fused greedy-action output.
    params3 = init_qnet_params(kp3, input_size, hidden1, hidden2, output_size)
    q3, act3 = qnet_forward(x, params3, out_dim=output_size, return_action=True)
    q3 = jax.block_until_ready(q3)
    ref3 = qnet_reference(x, params3, output_size)
    assert q3.shape == (batch, output_size)
    assert jnp.allclose(q3, ref3, atol=1e-5, rtol=1e-5)
    assert jnp.array_equal(act3, jnp.argmax(ref3, axis=-1).astype(act3.dtype))

    # 2-layer variant (hidden_size2 = 0 / None).
    params2 = init_qnet_params(kp2, input_size, hidden1, 0, output_size)
    q2 = qnet_forward(x, params2, out_dim=output_size)
    q2 = jax.block_until_ready(q2)
    ref2 = qnet_reference(x, params2, output_size)
    assert q2.shape == (batch, output_size)
    assert jnp.allclose(q2, ref2, atol=1e-5, rtol=1e-5)

    # Replay-buffer style batch exercising the gridded (parallel) batch path.
    xl = jax.random.normal(kxl, (300, input_size), dtype=jnp.float32)
    ql = qnet_forward(xl, params3, out_dim=output_size)
    ql = jax.block_until_ready(ql)
    refl = qnet_reference(xl, params3, output_size)
    assert ql.shape == (300, output_size)
    assert jnp.allclose(ql, refl, atol=1e-5, rtol=1e-5)

    print("KERNEL_OK")
</pallas_src>

<mosaic_0001>
module attributes {stable_mosaic.version = 11 : i64} {
  func.func @_qnet3_kernel(%arg0: i32, %arg1: memref<8x128xf32, #tpu.memory_space<vmem>>, %arg2: memref<128x128xf32, #tpu.memory_space<vmem>>, %arg3: memref<1x128xf32, #tpu.memory_space<vmem>>, %arg4: memref<128x128xf32, #tpu.memory_space<vmem>>, %arg5: memref<1x128xf32, #tpu.memory_space<vmem>>, %arg6: memref<128x128xf32, #tpu.memory_space<vmem>>, %arg7: memref<1x128xf32, #tpu.memory_space<vmem>>, %arg8: memref<8x128xf32, #tpu.memory_space<vmem>>, %arg9: memref<8x1xi32, #tpu.memory_space<vmem>>) attributes {dimension_semantics = [#tpu.dimension_semantics<parallel>], iteration_bounds = array<i64: 1>, scalar_prefetch = 0 : i64, scratch_operands = 0 : i64, tpu.core_type = #tpu.core_type<tc>, window_params = [{transform_indices = @transform_0, window_bounds = array<i64: 8, 128>}, {pipeline_mode = #tpu.pipeline_mode<synchronous>, transform_indices = @transform_1, window_bounds = array<i64: 128, 128>}, {pipeline_mode = #tpu.pipeline_mode<synchronous>, transform_indices = @transform_2, window_bounds = array<i64: 1, 128>}, {pipeline_mode = #tpu.pipeline_mode<synchronous>, transform_indices = @transform_3, window_bounds = array<i64: 128, 128>}, {pipeline_mode = #tpu.pipeline_mode<synchronous>, transform_indices = @transform_4, window_bounds = array<i64: 1, 128>}, {pipeline_mode = #tpu.pipeline_mode<synchronous>, transform_indices = @transform_5, window_bounds = array<i64: 128, 128>}, {pipeline_mode = #tpu.pipeline_mode<synchronous>, transform_indices = @transform_6, window_bounds = array<i64: 1, 128>}, {transform_indices = @transform_7, window_bounds = array<i64: 8, 128>}, {transform_indices = @transform_8, window_bounds = array<i64: 8, 1>}]} {
    %c0 = arith.constant 0 : index
    %c0_0 = arith.constant 0 : index
    %0 = vector.load %arg1[%c0, %c0_0] : memref<8x128xf32, #tpu.memory_space<vmem>>, vector<8x128xf32>
    %c0_1 = arith.constant 0 : index
    %c0_2 = arith.constant 0 : index
    %1 = vector.load %arg2[%c0_1, %c0_2] : memref<128x128xf32, #tpu.memory_space<vmem>>, vector<128x128xf32>
    %cst = arith.constant dense<0.000000e+00> : vector<8x128xf32>
    %2 = tpu.matmul %0, %1, %cst {dimension_numbers = #tpu.dot_dimension_numbers<[1], [0], [0], [1], [0, 0, 1, 1], [], []>} : vector<8x128xf32>, vector<128x128xf32>, vector<8x128xf32> -> vector<8x128xf32>
    %c0_3 = arith.constant 0 : index
    %c0_4 = arith.constant 0 : index
    %3 = vector.load %arg3[%c0_3, %c0_4] : memref<1x128xf32, #tpu.memory_space<vmem>>, vector<1x128xf32>
    %4 = vector.broadcast %3 : vector<1x128xf32> to vector<8x128xf32>
    %5 = arith.addf %2, %4 : vector<8x128xf32>
    %cst_5 = arith.constant 0.000000e+00 : f32
    %6 = vector.broadcast %cst_5 : f32 to vector<8x128xf32>
    %7 = arith.maximumf %5, %6 : vector<8x128xf32>
    %c0_6 = arith.constant 0 : index
    %c0_7 = arith.constant 0 : index
    %8 = vector.load %arg4[%c0_6, %c0_7] : memref<128x128xf32, #tpu.memory_space<vmem>>, vector<128x128xf32>
    %cst_8 = arith.constant dense<0.000000e+00> : vector<8x128xf32>
    %9 = tpu.matmul %7, %8, %cst_8 {dimension_numbers = #tpu.dot_dimension_numbers<[1], [0], [0], [1], [0, 0, 1, 1], [], []>} : vector<8x128xf32>, vector<128x128xf32>, vector<8x128xf32> -> vector<8x128xf32>
    %c0_9 = arith.constant 0 : index
    %c0_10 = arith.constant 0 : index
    %10 = vector.load %arg5[%c0_9, %c0_10] : memref<1x128xf32, #tpu.memory_space<vmem>>, vector<1x128xf32>
    %11 = vector.broadcast %10 : vector<1x128xf32> to vector<8x128xf32>
    %12 = arith.addf %9, %11 : vector<8x128xf32>
    %cst_11 = arith.constant 0.000000e+00 : f32
    %13 = vector.broadcast %cst_11 : f32 to vector<8x128xf32>
    %14 = arith.maximumf %12, %13 : vector<8x128xf32>
    %c0_12 = arith.constant 0 : index
    %c0_13 = arith.constant 0 : index
    %15 = vector.load %arg6[%c0_12, %c0_13] : memref<128x128xf32, #tpu.memory_space<vmem>>, vector<128x128xf32>
    %cst_14 = arith.constant dense<0.000000e+00> : vector<8x128xf32>
    %16 = tpu.matmul %14, %15, %cst_14 {dimension_numbers = #tpu.dot_dimension_numbers<[1], [0], [0], [1], [0, 0, 1, 1], [], []>} : vector<8x128xf32>, vector<128x128xf32>, vector<8x128xf32> -> vector<8x128xf32>
    %c0_15 = arith.constant 0 : index
    %c0_16 = arith.constant 0 : index
    %17 = vector.load %arg7[%c0_15, %c0_16] : memref<1x128xf32, #tpu.memory_space<vmem>>, vector<1x128xf32>
    %18 = vector.broadcast %17 : vector<1x128xf32> to vector<8x128xf32>
    %19 = arith.addf %16, %18 : vector<8x128xf32>
    %c0_17 = arith.constant 0 : index
    %c0_18 = arith.constant 0 : index
    %20 = vector.load %arg8[%c0_17, %c0_18] : memref<8x128xf32, #tpu.memory_space<vmem>>, vector<8x128xf32>
    tpu.vector_store %arg8[%c0_17, %c0_18], %19 {strides = array<i32>} : memref<8x128xf32, #tpu.memory_space<vmem>>, vector<8x128xf32>,
    %21 = tpu.iota {dimensions = array<i32: 1>} : vector<8x128xi32>
    %c3_i32 = arith.constant 3 : i32
    %22 = vector.broadcast %c3_i32 : i32 to vector<8x128xi32>
    %23 = arith.cmpi slt, %21, %22 : vector<8x128xi32>
    %cst_19 = arith.constant 0xFF800000 : f32
    %24 = vector.broadcast %cst_19 : f32 to vector<8x128xf32>
    %25 = arith.select %23, %19, %24 : vector<8x128xi1>, vector<8x128xf32>
    %cst_20 = arith.constant dense<0xFF800000> : vector<8xf32>
    %26 = vector.multi_reduction <maximumf>, %25, %cst_20 [1] : vector<8x128xf32> to vector<8xf32>
    %27 = vector.shape_cast %26 : vector<8xf32> to vector<8x1xf32>
    %28 = vector.broadcast %27 : vector<8x1xf32> to vector<8x128xf32>
    %29 = arith.cmpf oeq, %25, %28 : vector<8x128xf32>
    %30 = arith.andi %29, %23 : vector<8x128xi1>
    %c128_i32 = arith.constant 128 : i32
    %31 = vector.broadcast %c128_i32 : i32 to vector<8x128xi32>
    %32 = arith.select %30, %21, %31 : vector<8x128xi1>, vector<8x128xi32>
    %cst_21 = arith.constant dense<2147483647> : vector<8xi32>
    %33 = vector.multi_reduction <minsi>, %32, %cst_21 [1] : vector<8x128xi32> to vector<8xi32>
    %34 = vector.shape_cast %33 : vector<8xi32> to vector<8x1xi32>
    %c0_22 = arith.constant 0 : index
    %c0_23 = arith.constant 0 : index
    %35 = vector.load %arg9[%c0_22, %c0_23] : memref<8x1xi32, #tpu.memory_space<vmem>>, vector<8x1xi32>
    tpu.vector_store %arg9[%c0_22, %c0_23], %34 {strides = array<i32>} : memref<8x1xi32, #tpu.memory_space<vmem>>, vector<8x1xi32>,
    return
  }
  func.func @transform_0(%arg0: i32) -> (i32, i32) {
    %c0_i32 = arith.constant 0 : i32
    %c0_i32_0 = arith.constant 0 : i32
    return %arg0, %c0_i32 : i32, i32
  }
  func.func @transform_1(%arg0: i32) -> (i32, i32) {
    %c0_i32 = arith.constant 0 : i32
    %c0_i32_0 = arith.constant 0 : i32
    %c0_i32_1 = arith.constant 0 : i32
    return %c0_i32, %c0_i32_0 : i32, i32
  }
  func.func @transform_2(%arg0: i32) -> (i32, i32) {
    %c0_i32 = arith.constant 0 : i32
    %c0_i32_0 = arith.constant 0 : i32
    %c0_i32_1 = arith.constant 0 : i32
    return %c0_i32, %c0_i32_0 : i32, i32
  }
  func.func @transform_3(%arg0: i32) -> (i32, i32) {
    %c0_i32 = arith.constant 0 : i32
    %c0_i32_0 = arith.constant 0 : i32
    %c0_i32_1 = arith.constant 0 : i32
    return %c0_i32, %c0_i32_0 : i32, i32
  }
  func.func @transform_4(%arg0: i32) -> (i32, i32) {
    %c0_i32 = arith.constant 0 : i32
    %c0_i32_0 = arith.constant 0 : i32
    %c0_i32_1 = arith.constant 0 : i32
    return %c0_i32, %c0_i32_0 : i32, i32
  }
  func.func @transform_5(%arg0: i32) -> (i32, i32) {
    %c0_i32 = arith.constant 0 : i32
    %c0_i32_0 = arith.constant 0 : i32
    %c0_i32_1 = arith.constant 0 : i32
    return %c0_i32, %c0_i32_0 : i32, i32
  }
  func.func @transform_6(%arg0: i32) -> (i32, i32) {
    %c0_i32 = arith.constant 0 : i32
    %c0_i32_0 = arith.constant 0 : i32
    %c0_i32_1 = arith.constant 0 : i32
    return %c0_i32, %c0_i32_0 : i32, i32
  }
  func.func @transform_7(%arg0: i32) -> (i32, i32) {
    %c0_i32 = arith.constant 0 : i32
    %c0_i32_0 = arith.constant 0 : i32
    return %arg0, %c0_i32 : i32, i32
  }
  func.func @transform_8(%arg0: i32) -> (i32, i32) {
    %c0_i32 = arith.constant 0 : i32
    %c0_i32_0 = arith.constant 0 : i32
    return %arg0, %c0_i32 : i32, i32
  }
}

</mosaic_0001>

<llo_original>
// kernel: qnet_forward.1
$region0: #{qnet_forward.1}
  #allocation0 [shape = 'u32[]', space=smem, size = 0x4, offset = 0x4, fixed_abs, tag = 'smem constant byte address 0x4 - core index']
  #allocation1 [shape = 'u32[144,128]{1,0:T(1,128)}', space=vmem, size = 0x12000, scoped, tag = 'internal scratch']
  %s0 = inlined_call_operand.vmem [shape: f32[8,128], index: 0, kind: input, shape index: {}]
  %s1 = inlined_call_operand.hbm [shape: f32[128,128], index: 1, kind: input, shape index: {}]
  %s2 = inlined_call_operand.vmem [shape: f32[1,128], index: 2, kind: input, shape index: {}]
  %s3 = inlined_call_operand.hbm [shape: f32[128,128], index: 3, kind: input, shape index: {}]
  %s4 = inlined_call_operand.vmem [shape: f32[1,128], index: 4, kind: input, shape index: {}]
  %s5 = inlined_call_operand.hbm [shape: f32[128,128], index: 5, kind: input, shape index: {}]
  %s6 = inlined_call_operand.vmem [shape: f32[1,128], index: 6, kind: input, shape index: {}]
  %s7 = inlined_call_operand.vmem [shape: f32[8,128], index: 7, kind: output, shape index: {0}]
  %s8 = inlined_call_operand.vmem [shape: s32[8,1], index: 8, kind: output, shape index: {1}]
  %9 = xla_tuple %s7, %s8
  %s10 = sld [smem:[#allocation0]]
  $region58: #{qnet_forward.1} parent=0
    _
  %s12 = ssub.s32 1, %s10
  %s13 = scalar_select 0, %s12, %s10
  $region1: #{qnet_forward.1} parent=0
    #allocation2 [shape = 'u8[65536]{0}', space=vmem, size = 0x10000, scoped, tag = 'input window, operand 1, single buffered']
    #allocation3 [shape = 's32[1]{0}', space=sflag, size = 0x4, scoped, tag = 'scoped memory for qnet_forward.1']
    #allocation4 [shape = 'u8[65536]{0}', space=vmem, size = 0x10000, scoped, tag = 'input window, operand 3, single buffered']
    #allocation5 [shape = 's32[1]{0}', space=sflag, size = 0x4, scoped, tag = 'scoped memory for qnet_forward.1']
    #allocation6 [shape = 'u8[65536]{0}', space=vmem, size = 0x10000, scoped, tag = 'input window, operand 5, single buffered']
    %14 = vsyncpa [#allocation3], 0
    %15 = vsyncpa [#allocation5], 0
    // Predicated region
    $region2: #{qnet_forward.1} parent=1 // pred_check
      _
    $region3: #{qnet_forward.1} parent=1 // pred_check_branch
      %17 = sbr.rel (0) target = $region5
    $region4: #{qnet_forward.1} parent=1 // pred_region
      _
    $region5: #{qnet_forward.1} parent=1 // pred_fallthru
      _
    // Predicated region
    $region6: #{qnet_forward.1} parent=1 // pred_check
      _
    $region7: #{qnet_forward.1} parent=1 // pred_check_branch
      %19 = sbr.rel (0) target = $region9
    $region8: #{qnet_forward.1} parent=1 // pred_region
      %s21 = ssub.s32 2048, 2048
      %22 = vsyncadd [#allocation3], %s21
      %s23 = sshll.u32 [#allocation2], 4
      %s24 = int_to_ptr.vmem [resolvable:$true] %s23
      %29 = dma.hbm_to_vmem [thread:$0]  %s1, 2048, %s24, [#allocation3], 128, 128, 8
    $region9: #{qnet_forward.1} parent=1 // pred_fallthru
      _
    // Predicated region
    $region10: #{qnet_forward.1} parent=1 // pred_check
      _
    $region11: #{qnet_forward.1} parent=1 // pred_check_branch
      %31 = sbr.rel (0) target = $region13
    $region12: #{qnet_forward.1} parent=1 // pred_region
      _
    $region13: #{qnet_forward.1} parent=1 // pred_fallthru
      _
    // Predicated region
    $region14: #{qnet_forward.1} parent=1 // pred_check
      _
    $region15: #{qnet_forward.1} parent=1 // pred_check_branch
      %33 = sbr.rel (0) target = $region17
    $region16: #{qnet_forward.1} parent=1 // pred_region
      %s35 = ssub.s32 2048, 2048
      %36 = vsyncadd [#allocation5], %s35
      %s37 = sshll.u32 [#allocation4], 4
      %s38 = int_to_ptr.vmem [resolvable:$true] %s37
      %43 = dma.hbm_to_vmem [thread:$0]  %s3, 2048, %s38, [#allocation5], 128, 128, 8
    $region17: #{qnet_forward.1} parent=1 // pred_fallthru
      _
    // Predicated region
    $region18: #{qnet_forward.1} parent=1 // pred_check
      _
    $region19: #{qnet_forward.1} parent=1 // pred_check_branch
      %45 = sbr.rel (0) target = $region21
    $region20: #{qnet_forward.1} parent=1 // pred_region
      _
    $region21: #{qnet_forward.1} parent=1 // pred_fallthru
      _
    // Predicated region
    $region22: #{qnet_forward.1} parent=1 // pred_check
      _
    $region23: #{qnet_forward.1} parent=1 // pred_check_branch
      %47 = sbr.rel (0) target = $region25
    $region24: #{qnet_forward.1} parent=1 // pred_region
      %s49 = ssub.s32 2048, 2048
      %50 = vsyncadd [#allocation5], %s49
      %s51 = sshll.u32 [#allocation6], 4
      %s52 = int_to_ptr.vmem [resolvable:$true] %s51
      %57 = dma.hbm_to_vmem [thread:$0]  %s5, 2048, %s52, [#allocation5], 128, 128, 8
    $region25: #{qnet_forward.1} parent=1 // pred_fallthru
      _
    // Predicated region
    $region26: #{qnet_forward.1} parent=1 // pred_check
      _
    $region27: #{qnet_forward.1} parent=1 // pred_check_branch
      %59 = sbr.rel (0) target = $region29
    $region28: #{qnet_forward.1} parent=1 // pred_region
      _
    $region29: #{qnet_forward.1} parent=1 // pred_fallthru
      _
    // Predicated region
    $region30: #{qnet_forward.1} parent=1 // pred_check
      _
    $region31: #{qnet_forward.1} parent=1 // pred_check_branch
      %61 = sbr.rel (0) target = $region33
    $region32: #{qnet_forward.1} parent=1 // pred_region
      %62 = dma.done [#allocation3], 2048
    $region33: #{qnet_forward.1} parent=1 // pred_fallthru
      _
    // Predicated region
    $region34: #{qnet_forward.1} parent=1 // pred_check
      _
    $region35: #{qnet_forward.1} parent=1 // pred_check_branch
      %64 = sbr.rel (0) target = $region37
    $region36: #{qnet_forward.1} parent=1 // pred_region
      %65 = dma.done [#allocation5], 2048
    $region37: #{qnet_forward.1} parent=1 // pred_fallthru
      _
    // Predicated region
    $region38: #{qnet_forward.1} parent=1 // pred_check
      _
    $region39: #{qnet_forward.1} parent=1 // pred_check_branch
      %67 = sbr.rel (0) target = $region41
    $region40: #{qnet_forward.1} parent=1 // pred_region
      %68 = dma.done [#allocation5], 2048
    $region41: #{qnet_forward.1} parent=1 // pred_fallthru
      _
    %v69 = vld [vmem:[%s0] sm:$0xff]
    %v70 = vld [vmem:[#allocation2] sm:$0xff]
    %v71 = vld [vmem:[#allocation2 + $0x8] sm:$0xff]
    %v72 = vld [vmem:[#allocation2 + $0x10] sm:$0xff]
    %v73 = vld [vmem:[#allocation2 + $0x18] sm:$0xff]
    %v74 = vld [vmem:[#allocation2 + $0x20] sm:$0xff]
    %v75 = vld [vmem:[#allocation2 + $0x28] sm:$0xff]
    %v76 = vld [vmem:[#allocation2 + $0x30] sm:$0xff]
    %v77 = vld [vmem:[#allocation2 + $0x38] sm:$0xff]
    %v78 = vld [vmem:[#allocation2 + $0x40] sm:$0xff]
    %v79 = vld [vmem:[#allocation2 + $0x48] sm:$0xff]
    %v80 = vld [vmem:[#allocation2 + $0x50] sm:$0xff]
    %v81 = vld [vmem:[#allocation2 + $0x58] sm:$0xff]
    %v82 = vld [vmem:[#allocation2 + $0x60] sm:$0xff]
    %v83 = vld [vmem:[#allocation2 + $0x68] sm:$0xff]
    %v84 = vld [vmem:[#allocation2 + $0x70] sm:$0xff]
    %v85 = vld [vmem:[#allocation2 + $0x78] sm:$0xff]
    %v86 = vld [vmem:[%s2] sm:$0x1]
    %v88 = vlaneseq
    %v89 = vshrl.u32 %v88, 7
    %v90 = vsub.s32 0, %v89
    %v91 = vrot.slane %v86, %v90
    %93 = vmatprep.subr.mxu0 0.0
    %94 = vmatpush1.msra.mxu0 %v85
    %95 = vmatprep.subr.mxu0 0.0
    %96 = vmatpush1.msra.mxu0 %v84
    %97 = vmatprep.subr.mxu0 0.0
    %98 = vmatpush1.msra.mxu0 %v83
    %99 = vmatprep.subr.mxu0 0.0
    %100 = vmatpush1.msra.mxu0 %v82
    %101 = vmatprep.subr.mxu0 0.0
    %102 = vmatpush1.msra.mxu0 %v81
    %103 = vmatprep.subr.mxu0 0.0
    %104 = vmatpush1.msra.mxu0 %v80
    %105 = vmatprep.subr.mxu0 0.0
    %106 = vmatpush1.msra.mxu0 %v79
    %107 = vmatprep.subr.mxu0 0.0
    %108 = vmatpush1.msra.mxu0 %v78
    %109 = vmatprep.subr.mxu0 0.0
    %110 = vmatpush1.msra.mxu0 %v77
    %111 = vmatprep.subr.mxu0 0.0
    %112 = vmatpush1.msra.mxu0 %v76
    %113 = vmatprep.subr.mxu0 0.0
    %114 = vmatpush1.msra.mxu0 %v75
    %115 = vmatprep.subr.mxu0 0.0
    %116 = vmatpush1.msra.mxu0 %v74
    %117 = vmatprep.subr.mxu0 0.0
    %118 = vmatpush1.msra.mxu0 %v73
    %119 = vmatprep.subr.mxu0 0.0
    %120 = vmatpush1.msra.mxu0 %v72
    %121 = vmatprep.subr.mxu0 0.0
    %122 = vmatpush1.msra.mxu0 %v71
    %123 = vmatprep.subr.mxu0 0.0
    %124 = vmatpush1.msra.mxu0 %v70
    %125 = vmatprep.subr.mxu0 0.0
    %126 = vmatpush2.msra.mxu0 0.0
    %127 = vmatprep.subr.mxu0 0.0
    %128 = vmatpush2.msra.mxu0 0.0
    %129 = vmatprep.subr.mxu0 0.0
    %130 = vmatpush2.msra.mxu0 0.0
    %131 = vmatprep.subr.mxu0 0.0
    %132 = vmatpush2.msra.mxu0 0.0
    %133 = vmatprep.subr.mxu0 0.0
    %134 = vmatpush2.msra.mxu0 0.0
    %135 = vmatprep.subr.mxu0 0.0
    %136 = vmatpush2.msra.mxu0 0.0
    %137 = vmatprep.subr.mxu0 0.0
    %138 = vmatpush2.msra.mxu0 0.0
    %139 = vmatprep.subr.mxu0 0.0
    %140 = vmatpush2.msra.mxu0 0.0
    %141 = vmatprep.subr.mxu0 0.0
    %142 = vmatpush2.msra.mxu0 0.0
    %143 = vmatprep.subr.mxu0 0.0
    %144 = vmatpush2.msra.mxu0 0.0
    %145 = vmatprep.subr.mxu0 0.0
    %146 = vmatpush2.msra.mxu0 0.0
    %147 = vmatprep.subr.mxu0 0.0
    %148 = vmatpush2.msra.mxu0 0.0
    %149 = vmatprep.subr.mxu0 0.0
    %150 = vmatpush2.msra.mxu0 0.0
    %151 = vmatprep.subr.mxu0 0.0
    %152 = vmatpush2.msra.mxu0 0.0
    %153 = vmatprep.subr.mxu0 0.0
    %154 = vmatpush2.msra.mxu0 0.0
    %155 = vmatprep.subr.mxu0 0.0
    %156 = vmatpush2.msra.mxu0 0.0
    %157 = vmatprep.mubr.f32.mxu0 0.0
    %158 = vmatmul.mubr.f32.gmra.mxu0 %v69
    %v159 = vpop.f32.mrf.mxu0
    %v160 = vadd.f32 %v91, %v159
    %v161 = vpop.f32.mrf.mxu0
    %162 = vdwg.mxu0
    %v163 = vmax.f32 %v160, 0.0
    %v164 = vld [vmem:[#allocation4] sm:$0xff]
    %v165 = vld [vmem:[#allocation4 + $0x8] sm:$0xff]
    %v166 = vld [vmem:[#allocation4 + $0x10] sm:$0xff]
    %v167 = vld [vmem:[#allocation4 + $0x18] sm:$0xff]
    %v168 = vld [vmem:[#allocation4 + $0x20] sm:$0xff]
    %v169 = vld [vmem:[#allocation4 + $0x28] sm:$0xff]
    %v170 = vld [vmem:[#allocation4 + $0x30] sm:$0xff]
    %v171 = vld [vmem:[#allocation4 + $0x38] sm:$0xff]
    %v172 = vld [vmem:[#allocation4 + $0x40] sm:$0xff]
    %v173 = vld [vmem:[#allocation4 + $0x48] sm:$0xff]
    %v174 = vld [vmem:[#allocation4 + $0x50] sm:$0xff]
    %v175 = vld [vmem:[#allocation4 + $0x58] sm:$0xff]
    %v176 = vld [vmem:[#allocation4 + $0x60] sm:$0xff]
    %v177 = vld [vmem:[#allocation4 + $0x68] sm:$0xff]
    %v178 = vld [vmem:[#allocation4 + $0x70] sm:$0xff]
    %v179 = vld [vmem:[#allocation4 + $0x78] sm:$0xff]
    %v180 = vld [vmem:[%s4] sm:$0x1]
    %v182 = vlaneseq
    %v183 = vshrl.u32 %v182, 7
    %v184 = vsub.s32 0, %v183
    %v185 = vrot.slane %v180, %v184
    %187 = vmatprep.subr.mxu0 0.0
    %188 = vmatpush1.msra.mxu0 %v179
    %189 = vmatprep.subr.mxu0 0.0
    %190 = vmatpush1.msra.mxu0 %v178
    %191 = vmatprep.subr.mxu0 0.0
    %192 = vmatpush1.msra.mxu0 %v177
    %193 = vmatprep.subr.mxu0 0.0
    %194 = vmatpush1.msra.mxu0 %v176
    %195 = vmatprep.subr.mxu0 0.0
    %196 = vmatpush1.msra.mxu0 %v175
    %197 = vmatprep.subr.mxu0 0.0
    %198 = vmatpush1.msra.mxu0 %v174
    %199 = vmatprep.subr.mxu0 0.0
    %200 = vmatpush1.msra.mxu0 %v173
    %201 = vmatprep.subr.mxu0 0.0
    %202 = vmatpush1.msra.mxu0 %v172
    %203 = vmatprep.subr.mxu0 0.0
    %204 = vmatpush1.msra.mxu0 %v171
    %205 = vmatprep.subr.mxu0 0.0
    %206 = vmatpush1.msra.mxu0 %v170
    %207 = vmatprep.subr.mxu0 0.0
    %208 = vmatpush1.msra.mxu0 %v169
    %209 = vmatprep.subr.mxu0 0.0
    %210 = vmatpush1.msra.mxu0 %v168
    %211 = vmatprep.subr.mxu0 0.0
    %212 = vmatpush1.msra.mxu0 %v167
    %213 = vmatprep.subr.mxu0 0.0
    %214 = vmatpush1.msra.mxu0 %v166
    %215 = vmatprep.subr.mxu0 0.0
    %216 = vmatpush1.msra.mxu0 %v165
    %217 = vmatprep.subr.mxu0 0.0
    %218 = vmatpush1.msra.mxu0 %v164
    %219 = vmatprep.subr.mxu0 0.0
    %220 = vmatpush2.msra.mxu0 0.0
    %221 = vmatprep.subr.mxu0 0.0
    %222 = vmatpush2.msra.mxu0 0.0
    %223 = vmatprep.subr.mxu0 0.0
    %224 = vmatpush2.msra.mxu0 0.0
    %225 = vmatprep.subr.mxu0 0.0
    %226 = vmatpush2.msra.mxu0 0.0
    %227 = vmatprep.subr.mxu0 0.0
    %228 = vmatpush2.msra.mxu0 0.0
    %229 = vmatprep.subr.mxu0 0.0
    %230 = vmatpush2.msra.mxu0 0.0
    %231 = vmatprep.subr.mxu0 0.0
    %232 = vmatpush2.msra.mxu0 0.0
    %233 = vmatprep.subr.mxu0 0.0
    %234 = vmatpush2.msra.mxu0 0.0
    %235 = vmatprep.subr.mxu0 0.0
    %236 = vmatpush2.msra.mxu0 0.0
    %237 = vmatprep.subr.mxu0 0.0
    %238 = vmatpush2.msra.mxu0 0.0
    %239 = vmatprep.subr.mxu0 0.0
    %240 = vmatpush2.msra.mxu0 0.0
    %241 = vmatprep.subr.mxu0 0.0
    %242 = vmatpush2.msra.mxu0 0.0
    %243 = vmatprep.subr.mxu0 0.0
    %244 = vmatpush2.msra.mxu0 0.0
    %245 = vmatprep.subr.mxu0 0.0
    %246 = vmatpush2.msra.mxu0 0.0
    %247 = vmatprep.subr.mxu0 0.0
    %248 = vmatpush2.msra.mxu0 0.0
    %249 = vmatprep.subr.mxu0 0.0
    %250 = vmatpush2.msra.mxu0 0.0
    %251 = vmatprep.mubr.f32.mxu0 0.0
    %252 = vmatmul.mubr.f32.gmra.mxu0 %v163
    %v253 = vpop.f32.mrf.mxu0
    %v254 = vadd.f32 %v185, %v253
    %v255 = vpop.f32.mrf.mxu0
    %256 = vdwg.mxu0
    %v257 = vmax.f32 %v254, 0.0
    %v258 = vld [vmem:[#allocation6] sm:$0xff]
    %v259 = vld [vmem:[#allocation6 + $0x8] sm:$0xff]
    %v260 = vld [vmem:[#allocation6 + $0x10] sm:$0xff]
    %v261 = vld [vmem:[#allocation6 + $0x18] sm:$0xff]
    %v262 = vld [vmem:[#allocation6 + $0x20] sm:$0xff]
    %v263 = vld [vmem:[#allocation6 + $0x28] sm:$0xff]
    %v264 = vld [vmem:[#allocation6 + $0x30] sm:$0xff]
    %v265 = vld [vmem:[#allocation6 + $0x38] sm:$0xff]
    %v266 = vld [vmem:[#allocation6 + $0x40] sm:$0xff]
    %v267 = vld [vmem:[#allocation6 + $0x48] sm:$0xff]
    %v268 = vld [vmem:[#allocation6 + $0x50] sm:$0xff]
    %v269 = vld [vmem:[#allocation6 + $0x58] sm:$0xff]
    %v270 = vld [vmem:[#allocation6 + $0x60] sm:$0xff]
    %v271 = vld [vmem:[#allocation6 + $0x68] sm:$0xff]
    %v272 = vld [vmem:[#allocation6 + $0x70] sm:$0xff]
    %v273 = vld [vmem:[#allocation6 + $0x78] sm:$0xff]
    %v274 = vld [vmem:[%s6] sm:$0x1]
    %v276 = vlaneseq
    %v277 = vshrl.u32 %v276, 7
    %v278 = vsub.s32 0, %v277
    %v279 = vrot.slane %v274, %v278
    %281 = vmatprep.subr.mxu0 0.0
    %282 = vmatpush1.msra.mxu0 %v273
    %283 = vmatprep.subr.mxu0 0.0
    %284 = vmatpush1.msra.mxu0 %v272
    %285 = vmatprep.subr.mxu0 0.0
    %286 = vmatpush1.msra.mxu0 %v271
    %287 = vmatprep.subr.mxu0 0.0
    %288 = vmatpush1.msra.mxu0 %v270
    %289 = vmatprep.subr.mxu0 0.0
    %290 = vmatpush1.msra.mxu0 %v269
    %291 = vmatprep.subr.mxu0 0.0
    %292 = vmatpush1.msra.mxu0 %v268
    %293 = vmatprep.subr.mxu0 0.0
    %294 = vmatpush1.msra.mxu0 %v267
    %295 = vmatprep.subr.mxu0 0.0
    %296 = vmatpush1.msra.mxu0 %v266
    %297 = vmatprep.subr.mxu0 0.0
    %298 = vmatpush1.msra.mxu0 %v265
    %299 = vmatprep.subr.mxu0 0.0
    %300 = vmatpush1.msra.mxu0 %v264
    %301 = vmatprep.subr.mxu0 0.0
    %302 = vmatpush1.msra.mxu0 %v263
    %303 = vmatprep.subr.mxu0 0.0
    %304 = vmatpush1.msra.mxu0 %v262
    %305 = vmatprep.subr.mxu0 0.0
    %306 = vmatpush1.msra.mxu0 %v261
    %307 = vmatprep.subr.mxu0 0.0
    %308 = vmatpush1.msra.mxu0 %v260
    %309 = vmatprep.subr.mxu0 0.0
    %310 = vmatpush1.msra.mxu0 %v259
    %311 = vmatprep.subr.mxu0 0.0
    %312 = vmatpush1.msra.mxu0 %v258
    %313 = vmatprep.subr.mxu0 0.0
    %314 = vmatpush2.msra.mxu0 0.0
    %315 = vmatprep.subr.mxu0 0.0
    %316 = vmatpush2.msra.mxu0 0.0
    %317 = vmatprep.subr.mxu0 0.0
    %318 = vmatpush2.msra.mxu0 0.0
    %319 = vmatprep.subr.mxu0 0.0
    %320 = vmatpush2.msra.mxu0 0.0
    %321 = vmatprep.subr.mxu0 0.0
    %322 = vmatpush2.msra.mxu0 0.0
    %323 = vmatprep.subr.mxu0 0.0
    %324 = vmatpush2.msra.mxu0 0.0
    %325 = vmatprep.subr.mxu0 0.0
    %326 = vmatpush2.msra.mxu0 0.0
    %327 = vmatprep.subr.mxu0 0.0
    %328 = vmatpush2.msra.mxu0 0.0
    %329 = vmatprep.subr.mxu0 0.0
    %330 = vmatpush2.msra.mxu0 0.0
    %331 = vmatprep.subr.mxu0 0.0
    %332 = vmatpush2.msra.mxu0 0.0
    %333 = vmatprep.subr.mxu0 0.0
    %334 = vmatpush2.msra.mxu0 0.0
    %335 = vmatprep.subr.mxu0 0.0
    %336 = vmatpush2.msra.mxu0 0.0
    %337 = vmatprep.subr.mxu0 0.0
    %338 = vmatpush2.msra.mxu0 0.0
    %339 = vmatprep.subr.mxu0 0.0
    %340 = vmatpush2.msra.mxu0 0.0
    %341 = vmatprep.subr.mxu0 0.0
    %342 = vmatpush2.msra.mxu0 0.0
    %343 = vmatprep.subr.mxu0 0.0
    %344 = vmatpush2.msra.mxu0 0.0
    %345 = vmatprep.mubr.f32.mxu0 0.0
    %346 = vmatmul.mubr.f32.gmra.mxu0 %v257
    %v347 = vpop.f32.mrf.mxu0
    %v348 = vadd.f32 %v279, %v347
    %v349 = vpop.f32.mrf.mxu0
    %350 = vdwg.mxu0
    %351 = vst [vmem:[%s7] sm:$0xff] %v348
    %v352 = vlaneseq
    %v353 = vand.u32 %v352, 127
    %vm354 = vcmp.lt.s32.totalorder %v353, 3
    %v355 = vsel %vm354, %v348, -inf
    %356 = vmax.xlane.f32.xlu0 %v355
    %v357 = vpop.xlane.xlu0 %356
    %vm358 = vcmp.eq.f32.partialorder %v355, %v357
    %vm359 = vmand %vm358, %vm354
    %v360 = vsel %vm359, %v353, 128
    %v361 = vand.u32 %v360, 65535
    %v362 = vshra.s32 %v360, 16
    %v363 = vcvt.s32.f32 %v361
    %v364 = vcvt.s32.f32 %v362
    %365 = vmin.xlane.f32.xlu0 %v364
    %v366 = vpop.xlane.xlu0 %365
    %vm367 = vcmp.eq.f32.partialorder %v364, %v366
    %v368 = vsel %vm367, %v363, inf
    %369 = vmin.xlane.f32.xlu0 %v368
    %v370 = vpop.xlane.xlu0 %369
    %v371 = vcvt.f32.s32 %v370
    %v372 = vcvt.f32.s32 %v366
    %v373 = vshll.u32 %v372, 16
    %v374 = vadd.s32 %v373, %v371
    %vm375 = vcmask 7168
    %376 = vst.msk [vmem:[%s8] sm:$0xff] %vm375, %v374
    // Predicated region
    $region42: #{qnet_forward.1} parent=1 // pred_check
      _
    $region43: #{qnet_forward.1} parent=1 // pred_check_branch
      %378 = sbr.rel (0) target = $region45
    $region44: #{qnet_forward.1} parent=1 // pred_region
      _
    $region45: #{qnet_forward.1} parent=1 // pred_fallthru
      _
    // Predicated region
    $region46: #{qnet_forward.1} parent=1 // pred_check
      _
    $region47: #{qnet_forward.1} parent=1 // pred_check_branch
      %380 = sbr.rel (0) target = $region49
    $region48: #{qnet_forward.1} parent=1 // pred_region
      _
    $region49: #{qnet_forward.1} parent=1 // pred_fallthru
      _
    // Predicated region
    $region50: #{qnet_forward.1} parent=1 // pred_check
      _
    $region51: #{qnet_forward.1} parent=1 // pred_check_branch
      %382 = sbr.rel (0) target = $region53
    $region52: #{qnet_forward.1} parent=1 // pred_region
      _
    $region53: #{qnet_forward.1} parent=1 // pred_fallthru
      _
    // Predicated region
    $region54: #{qnet_forward.1} parent=1 // pred_check
      _
    $region55: #{qnet_forward.1} parent=1 // pred_check_branch
      %384 = sbr.rel (0) target = $region57
    $region56: #{qnet_forward.1} parent=1 // pred_region
      _
    $region57: #{qnet_forward.1} parent=1 // pred_fallthru
      _
    %385 = vsyncpa [#allocation3], 1
    %386 = vsyncpa [#allocation5], 1

</llo_original>
